<compile_context>
chip_gen: v7x
topology: tpu7x:2x2x1
jax: 0.10.0
libtpu: 0.0.40
codegen_flags: <defaults>
</compile_context>

<pallas_src>
import functools

import jax
import jax.numpy as jnp
from jax.experimental import pallas as pl
from jax.experimental.pallas import tpu as pltpu


_REDUCE_CHUNK = 256  # lanes per f32 partial-sum step in the chunked squeeze


# --------------------------------------------------------------------------
# Generation-aware VMEM budgets
# --------------------------------------------------------------------------
def _vmem_capacity_bytes():
    try:
        info = pltpu.get_tpu_info()
        cap = getattr(info, "vmem_capacity_bytes", None)
        if cap:
            return int(cap)
    except Exception:
        pass
    return 64 << 20  # conservative fallback (v7x-class per-TC VMEM)


def _tpu_budgets():
    """Returns (vmem_limit_bytes, fused_slab_limit, streaming_tile_bytes)."""
    cap = _vmem_capacity_bytes()
    if cap >= (128 << 20):
        # v5e / v6e: 128 MiB physical VMEM.
        vmem_limit = 100 << 20
        fused_limit = 20 << 20        # ~ (limit - weights/temps) / 4 (2x in + 2x out)
        tile_bytes = 4 << 20          # pass-2 moves 2 blocks/step -> 16 MiB buffered
    else:
        # v7x-class: 64 MiB physical VMEM per TensorCore (or unknown -> be safe).
        vmem_limit = min(48 << 20, max(cap - (16 << 20), 16 << 20))
        fused_limit = max(vmem_limit // 5, 2 << 20)    # ~9 MiB on v7x
        tile_bytes = max(vmem_limit // 16, 1 << 20)    # ~3 MiB on v7x
    return vmem_limit, fused_limit, tile_bytes


# --------------------------------------------------------------------------
# In-kernel helpers
# --------------------------------------------------------------------------
def _rowsum_f32_chunked(x_ref, n_lanes, chunk, limit=None):
    """Sum x_ref[0] (shape (C, n_lanes)) over lanes with f32 accumulation,
    WITHOUT materializing a full-width f32 copy of the slab (the review's
    option (b): chunked partial sums).  Lanes with in-tile index >= `limit`
    (a traced scalar) are treated as zero; limit=None disables masking."""
    c = x_ref.shape[1]

    def load(off, width):
        v = x_ref[0, :, pl.ds(off, width)].astype(jnp.float32)
        if limit is not None:
            lane = jax.lax.broadcasted_iota(jnp.int32, (c, width), 1) + off
            v = jnp.where(lane < limit, v, jnp.float32(0.0))
        return v

    n_full = n_lanes // chunk
    rem = n_lanes - n_full * chunk
    y = jnp.zeros((c,), jnp.float32)
    if n_full > 0:
        def body(i, acc):
            return acc + load(pl.multiple_of(i * chunk, chunk), chunk)
        acc = jax.lax.fori_loop(0, n_full, body,
                                jnp.zeros((c, chunk), jnp.float32))
        y = jnp.sum(acc, axis=-1)
    if rem > 0:
        y = y + jnp.sum(load(n_full * chunk, rem), axis=-1)
    return y  # (C,) f32


# --------------------------------------------------------------------------
# Kernels
# --------------------------------------------------------------------------
def _se_fused_kernel(x_ref, w1_ref, b1_ref, w2_ref, b2_ref, o_ref, *, hw, chunk):
    # x_ref: (1, C, HW)  w1_ref: (C, Cr) f32, pre-scaled by 1/HW
    # b1_ref: (1, Cr) f32  w2_ref: (Cr, C) f32  b2_ref: (1, C) f32
    # Squeeze: chunked f32 partial sums (no full-slab f32 upcast temp).
    y = _rowsum_f32_chunked(x_ref, hw, chunk)                     # (C,) f32

    # Excitation: tiny FC -> ReLU -> FC -> sigmoid (1/HW folded into w1).
    h = jnp.dot(y[None, :], w1_ref[...],
                preferred_element_type=jnp.float32) + b1_ref[...]  # (1, Cr)
    h = jnp.maximum(h, 0.0)
    s = jax.nn.sigmoid(
        jnp.dot(h, w2_ref[...],
                preferred_element_type=jnp.float32) + b2_ref[...])  # (1, C)

    # Scale: re-read x from VMEM in the input dtype and broadcast over lanes.
    o_ref[...] = (x_ref[...] * s.reshape(1, -1, 1).astype(x_ref.dtype)
                  ).astype(o_ref.dtype)


def _se_pool_kernel(x_ref, ysum_ref, *, hw, hw_tile, needs_mask, chunk):
    # x_ref: (1, C, hw_tile)   ysum_ref: (1, C, 1) f32, resident over HW axis.
    t = pl.program_id(1)

    @pl.when(t == 0)
    def _init():
        ysum_ref[...] = jnp.zeros_like(ysum_ref)

    # Only the last tile can be partial; mask its out-of-range lanes to zero
    # (Pallas pads partial input blocks with unspecified data).
    limit = (hw - t * hw_tile) if needs_mask else None
    y = _rowsum_f32_chunked(x_ref, hw_tile, chunk, limit=limit)   # (C,) f32
    ysum_ref[...] += y.reshape(1, -1, 1)


def _se_scale_kernel(s_ref, x_ref, o_ref):
    # s_ref: (1, C, 1) already in x.dtype   x_ref / o_ref: (1, C, hw_tile)
    o_ref[...] = (x_ref[...] * s_ref[...]).astype(o_ref.dtype)


# --------------------------------------------------------------------------
# Wrappers
# --------------------------------------------------------------------------
def _pick_hw_tile(hw, c, itemsize, target_bytes):
    """Lane-dense HW tile: largest multiple of 128 such that a (1, C, tile)
    block is ~target_bytes.  Prefers exact divisors of hw; otherwise returns a
    non-divisor (last partial tile is lane-masked in the pool and write-masked
    by Pallas in the scale pass) instead of a huge full-row fallback."""
    max_lanes = (target_bytes // max(1, c * itemsize)) // 128 * 128
    max_lanes = max(128, max_lanes)
    if hw <= max_lanes:
        return hw                      # single full-row tile (always legal)
    best = None
    for t in range(128, max_lanes + 1, 128):
        if hw % t == 0:
            best = t
    if best is not None:
        return best
    return max_lanes                   # partial last tile, masked


def _se_fused(x, w1, b1, w2, b2, vmem_limit):
    B, C, H, W = x.shape
    HW = H * W
    Cr = w1.shape[0]
    x_flat = x.reshape(B, C, HW)

    # Fold the 1/HW mean into the tiny first FC weight; KEEP IT f32 so there
    # is no extra rounding step vs the PyTorch reference.
    w1_t = (w1.astype(jnp.float32) * (1.0 / HW)).T            # (C, Cr) f32
    w2_t = w2.astype(jnp.float32).T                           # (Cr, C) f32
    b1_r = b1.reshape(1, Cr).astype(jnp.float32)
    b2_r = b2.reshape(1, C).astype(jnp.float32)

    kernel = functools.partial(_se_fused_kernel, hw=HW, chunk=_REDUCE_CHUNK)

    out_flat = pl.pallas_call(
        kernel,
        out_shape=jax.ShapeDtypeStruct((B, C, HW), x.dtype),
        grid_spec=pltpu.PrefetchScalarGridSpec(
            num_scalar_prefetch=0,
            grid=(B,),
            in_specs=[
                pl.BlockSpec((1, C, HW), lambda b: (b, 0, 0)),
                pl.BlockSpec((C, Cr), lambda b: (0, 0)),
                pl.BlockSpec((1, Cr), lambda b: (0, 0)),
                pl.BlockSpec((Cr, C), lambda b: (0, 0)),
                pl.BlockSpec((1, C), lambda b: (0, 0)),
            ],
            out_specs=pl.BlockSpec((1, C, HW), lambda b: (b, 0, 0)),
        ),
        compiler_params=pltpu.CompilerParams(
            dimension_semantics=("parallel",),
            vmem_limit_bytes=vmem_limit),
    )(x_flat, w1_t, b1_r, w2_t, b2_r)
    return out_flat.reshape(B, C, H, W)


def _se_two_pass(x, w1, b1, w2, b2, vmem_limit, tile_bytes):
    B, C, H, W = x.shape
    HW = H * W
    x_flat = x.reshape(B, C, HW)
    hw_tile = _pick_hw_tile(HW, C, x.dtype.itemsize, tile_bytes)
    n_hw = pl.cdiv(HW, hw_tile)
    needs_mask = (HW % hw_tile) != 0

    # ---- Pass 1: tiled global-sum pool with a resident f32 accumulator ----
    # TODO(synk): add a 2-way "parallel" HW split (partial sums combined in the
    # MLP step below) to keep both v7x TensorCores busy when B == 1.
    pool_kernel = functools.partial(
        _se_pool_kernel, hw=HW, hw_tile=hw_tile,
        needs_mask=needs_mask, chunk=_REDUCE_CHUNK)

    y_sum = pl.pallas_call(
        pool_kernel,
        out_shape=jax.ShapeDtypeStruct((B, C, 1), jnp.float32),
        grid_spec=pltpu.PrefetchScalarGridSpec(
            num_scalar_prefetch=0,
            grid=(B, n_hw),
            in_specs=[pl.BlockSpec((1, C, hw_tile), lambda b, t: (b, 0, t))],
            out_specs=pl.BlockSpec((1, C, 1), lambda b, t: (b, 0, 0)),
        ),
        compiler_params=pltpu.CompilerParams(
            dimension_semantics=("parallel", "arbitrary"),
            vmem_limit_bytes=vmem_limit),
    )(x_flat)

    # ---- Excitation MLP (negligible FLOPs) in plain JAX, f32 ----
    y = y_sum[..., 0] * (1.0 / HW)                                  # (B, C)
    h = jnp.maximum(y @ w1.astype(jnp.float32).T + b1.astype(jnp.float32), 0.0)
    s = jax.nn.sigmoid(h @ w2.astype(jnp.float32).T + b2.astype(jnp.float32))
    s = s.astype(x.dtype).reshape(B, C, 1)   # pre-cast: no per-step cast in pass 2

    # ---- Pass 2: tiled, pipelined broadcast-scale over x ----
    out_flat = pl.pallas_call(
        _se_scale_kernel,
        out_shape=jax.ShapeDtypeStruct((B, C, HW), x.dtype),
        grid_spec=pltpu.PrefetchScalarGridSpec(
            num_scalar_prefetch=0,
            grid=(B, n_hw),
            in_specs=[
                pl.BlockSpec((1, C, 1), lambda b, t: (b, 0, 0)),
                pl.BlockSpec((1, C, hw_tile), lambda b, t: (b, 0, t)),
            ],
            out_specs=pl.BlockSpec((1, C, hw_tile), lambda b, t: (b, 0, t)),
        ),
        compiler_params=pltpu.CompilerParams(
            dimension_semantics=("parallel", "parallel"),
            vmem_limit_bytes=vmem_limit),
    )(s, x_flat)
    return out_flat.reshape(B, C, H, W)


def se_layer(x, w1, b1, w2, b2, *, force_two_pass=False):
    """x: (B, C, H, W) NCHW.  w1: (Cr, C), b1: (Cr,), w2: (C, Cr), b2: (C,)
    (PyTorch nn.Linear weight layout: (out_features, in_features)).

    Chooses the fused single-pass (2x HBM traffic) whenever the per-batch
    (C, HW) slab fits a generation-aware VMEM budget (double-buffered in +
    out), otherwise the tiled pool + scale two-pass structure (3x traffic)."""
    _, C, H, W = x.shape
    vmem_limit, fused_limit, tile_bytes = _tpu_budgets()
    slab_bytes = C * H * W * x.dtype.itemsize
    if not force_two_pass and slab_bytes <= fused_limit:
        return _se_fused(x, w1, b1, w2, b2, vmem_limit)
    return _se_two_pass(x, w1, b1, w2, b2, vmem_limit, tile_bytes)


def se_layer_ref(x, w1, b1, w2, b2):
    """Pure-JAX reference mirroring the PyTorch forward."""
    y = jnp.mean(x, axis=(2, 3))                       # (B, C)
    h = jnp.maximum(y @ w1.T + b1, 0.0)                # (B, Cr)
    s = jax.nn.sigmoid(h @ w2.T + b2)                  # (B, C)
    return x * s[:, :, None, None]


if __name__ == "__main__":
    # Small shapes consistent with the module: channel=16, reduction=8 -> hidden=2
    B, C, H, W = 2, 16, 8, 8
    reduction = 8
    Cr = C // reduction

    key = jax.random.PRNGKey(0)
    kx, k1, k2, k3, k4, kx3 = jax.random.split(key, 6)

    x = jax.random.normal(kx, (B, C, H, W), dtype=jnp.float32)
    w1 = 0.1 * jax.random.normal(k1, (Cr, C), dtype=jnp.float32)
    b1 = 0.1 * jax.random.normal(k2, (Cr,), dtype=jnp.float32)
    w2 = 0.1 * jax.random.normal(k3, (C, Cr), dtype=jnp.float32)
    b2 = 0.1 * jax.random.normal(k4, (C,), dtype=jnp.float32)

    ref = se_layer_ref(x, w1, b1, w2, b2)

    # Fused single-pass path (default for small per-batch slabs).
    out = se_layer(x, w1, b1, w2, b2)
    jax.block_until_ready(out)
    assert out.shape == x.shape
    assert jnp.allclose(out, ref, atol=1e-5, rtol=1e-5), "fused path mismatch"

    # Two-pass (pool + scale) path, forced here to exercise the tiled kernels.
    out2 = se_layer(x, w1, b1, w2, b2, force_two_pass=True)
    jax.block_until_ready(out2)
    assert jnp.allclose(out2, ref, atol=1e-5, rtol=1e-5), "two-pass mismatch"

    # Two-pass with an awkward spatial size and a tiny tile budget so the
    # last HW tile is partial -> exercises the masked pool / masked writes.
    x3 = jax.random.normal(kx3, (B, C, 16, 20), dtype=jnp.float32)  # HW=320
    ref3 = se_layer_ref(x3, w1, b1, w2, b2)
    vmem_limit, _, _ = _tpu_budgets()
    out3 = _se_two_pass(x3, w1, b1, w2, b2, vmem_limit, tile_bytes=16 << 10)
    jax.block_until_ready(out3)
    assert jnp.allclose(out3, ref3, atol=1e-5, rtol=1e-5), "masked two-pass mismatch"

    print("KERNEL_OK")
</pallas_src>

<mosaic_0001>
module attributes {stable_mosaic.version = 11 : i64} {
  func.func @_se_fused_kernel(%arg0: i32, %arg1: memref<1x16x64xf32, #tpu.memory_space<vmem>>, %arg2: memref<16x2xf32, #tpu.memory_space<vmem>>, %arg3: memref<1x2xf32, #tpu.memory_space<vmem>>, %arg4: memref<2x16xf32, #tpu.memory_space<vmem>>, %arg5: memref<1x16xf32, #tpu.memory_space<vmem>>, %arg6: memref<1x16x64xf32, #tpu.memory_space<vmem>>) attributes {dimension_semantics = [#tpu.dimension_semantics<parallel>], iteration_bounds = array<i64: 2>, scalar_prefetch = 0 : i64, scratch_operands = 0 : i64, tpu.core_type = #tpu.core_type<tc>, window_params = [{transform_indices = @transform_0, window_bounds = array<i64: 1, 16, 64>}, {pipeline_mode = #tpu.pipeline_mode<synchronous>, transform_indices = @transform_1, window_bounds = array<i64: 16, 2>}, {pipeline_mode = #tpu.pipeline_mode<synchronous>, transform_indices = @transform_2, window_bounds = array<i64: 1, 2>}, {pipeline_mode = #tpu.pipeline_mode<synchronous>, transform_indices = @transform_3, window_bounds = array<i64: 2, 16>}, {pipeline_mode = #tpu.pipeline_mode<synchronous>, transform_indices = @transform_4, window_bounds = array<i64: 1, 16>}, {transform_indices = @transform_5, window_bounds = array<i64: 1, 16, 64>}]} {
    %cst = arith.constant 0.000000e+00 : f32
    %0 = vector.broadcast %cst : f32 to vector<16xf32>
    %c0 = arith.constant 0 : index
    %c0_0 = arith.constant 0 : index
    %c0_1 = arith.constant 0 : index
    %1 = vector.load %arg1[%c0, %c0_0, %c0_1] : memref<1x16x64xf32, #tpu.memory_space<vmem>>, vector<1x16x64xf32>
    %2 = vector.shape_cast %1 : vector<1x16x64xf32> to vector<16x64xf32>
    %cst_2 = arith.constant dense<0.000000e+00> : vector<16xf32>
    %3 = vector.multi_reduction <add>, %2, %cst_2 [1] : vector<16x64xf32> to vector<16xf32>
    %4 = arith.addf %0, %3 : vector<16xf32>
    %5 = vector.shape_cast %4 : vector<16xf32> to vector<1x16xf32>
    %c0_3 = arith.constant 0 : index
    %c0_4 = arith.constant 0 : index
    %6 = vector.load %arg2[%c0_3, %c0_4] : memref<16x2xf32, #tpu.memory_space<vmem>>, vector<16x2xf32>
    %cst_5 = arith.constant dense<0.000000e+00> : vector<1x2xf32>
    %7 = tpu.matmul %5, %6, %cst_5 {dimension_numbers = #tpu.dot_dimension_numbers<[1], [0], [0], [1], [0, 0, 1, 1], [], []>} : vector<1x16xf32>, vector<16x2xf32>, vector<1x2xf32> -> vector<1x2xf32>
    %c0_6 = arith.constant 0 : index
    %c0_7 = arith.constant 0 : index
    %8 = vector.load %arg3[%c0_6, %c0_7] : memref<1x2xf32, #tpu.memory_space<vmem>>, vector<1x2xf32>
    %9 = arith.addf %7, %8 : vector<1x2xf32>
    %cst_8 = arith.constant 0.000000e+00 : f32
    %10 = vector.broadcast %cst_8 : f32 to vector<1x2xf32>
    %11 = arith.maximumf %9, %10 : vector<1x2xf32>
    %c0_9 = arith.constant 0 : index
    %c0_10 = arith.constant 0 : index
    %12 = vector.load %arg4[%c0_9, %c0_10] : memref<2x16xf32, #tpu.memory_space<vmem>>, vector<2x16xf32>
    %cst_11 = arith.constant dense<0.000000e+00> : vector<1x16xf32>
    %13 = tpu.matmul %11, %12, %cst_11 {dimension_numbers = #tpu.dot_dimension_numbers<[1], [0], [0], [1], [0, 0, 1, 1], [], []>} : vector<1x2xf32>, vector<2x16xf32>, vector<1x16xf32> -> vector<1x16xf32>
    %c0_12 = arith.constant 0 : index
    %c0_13 = arith.constant 0 : index
    %14 = vector.load %arg5[%c0_12, %c0_13] : memref<1x16xf32, #tpu.memory_space<vmem>>, vector<1x16xf32>
    %15 = arith.addf %13, %14 : vector<1x16xf32>
    %16 = arith.negf %15 : vector<1x16xf32>
    %17 = math.exp %16 : vector<1x16xf32>
    %cst_14 = arith.constant 1.000000e+00 : f32
    %18 = vector.broadcast %cst_14 : f32 to vector<1x16xf32>
    %19 = arith.addf %18, %17 : vector<1x16xf32>
    %20 = arith.divf %18, %19 : vector<1x16xf32>
    %c0_15 = arith.constant 0 : index
    %c0_16 = arith.constant 0 : index
    %c0_17 = arith.constant 0 : index
    %21 = vector.load %arg1[%c0_15, %c0_16, %c0_17] : memref<1x16x64xf32, #tpu.memory_space<vmem>>, vector<1x16x64xf32>
    %22 = vector.shape_cast %20 : vector<1x16xf32> to vector<1x16x1xf32>
    %23 = vector.broadcast %22 : vector<1x16x1xf32> to vector<1x16x64xf32>
    %24 = arith.mulf %21, %23 : vector<1x16x64xf32>
    %c0_18 = arith.constant 0 : index
    %c0_19 = arith.constant 0 : index
    %c0_20 = arith.constant 0 : index
    %25 = vector.load %arg6[%c0_18, %c0_19, %c0_20] : memref<1x16x64xf32, #tpu.memory_space<vmem>>, vector<1x16x64xf32>
    tpu.vector_store %arg6[%c0_18, %c0_19, %c0_20], %24 {strides = array<i32>} : memref<1x16x64xf32, #tpu.memory_space<vmem>>, vector<1x16x64xf32>,
    return
  }
  func.func @transform_0(%arg0: i32) -> (i32, i32, i32) {
    %c0_i32 = arith.constant 0 : i32
    %c0_i32_0 = arith.constant 0 : i32
    %c0_i32_1 = arith.constant 0 : i32
    return %arg0, %c0_i32, %c0_i32_0 : i32, i32, i32
  }
  func.func @transform_1(%arg0: i32) -> (i32, i32) {
    %c0_i32 = arith.constant 0 : i32
    %c0_i32_0 = arith.constant 0 : i32
    %c0_i32_1 = arith.constant 0 : i32
    return %c0_i32, %c0_i32_0 : i32, i32
  }
  func.func @transform_2(%arg0: i32) -> (i32, i32) {
    %c0_i32 = arith.constant 0 : i32
    %c0_i32_0 = arith.constant 0 : i32
    %c0_i32_1 = arith.constant 0 : i32
    return %c0_i32, %c0_i32_0 : i32, i32
  }
  func.func @transform_3(%arg0: i32) -> (i32, i32) {
    %c0_i32 = arith.constant 0 : i32
    %c0_i32_0 = arith.constant 0 : i32
    %c0_i32_1 = arith.constant 0 : i32
    return %c0_i32, %c0_i32_0 : i32, i32
  }
  func.func @transform_4(%arg0: i32) -> (i32, i32) {
    %c0_i32 = arith.constant 0 : i32
    %c0_i32_0 = arith.constant 0 : i32
    %c0_i32_1 = arith.constant 0 : i32
    return %c0_i32, %c0_i32_0 : i32, i32
  }
  func.func @transform_5(%arg0: i32) -> (i32, i32, i32) {
    %c0_i32 = arith.constant 0 : i32
    %c0_i32_0 = arith.constant 0 : i32
    %c0_i32_1 = arith.constant 0 : i32
    return %arg0, %c0_i32, %c0_i32_0 : i32, i32, i32
  }
}

</mosaic_0001>

<llo_original>
// kernel: tpu_custom_call.1
$region0: #{tpu_custom_call.1}
  #allocation0 [shape = 'u32[]', space=smem, size = 0x4, offset = 0x4, fixed_abs, tag = 'smem constant byte address 0x4 - core index']
  #allocation1 [shape = 'u32[144,128]{1,0:T(1,128)}', space=vmem, size = 0x12000, scoped, tag = 'internal scratch']
  %s0 = inlined_call_operand.hbm [shape: f32[2,16,64], index: 0, kind: input, shape index: {}]
  %s1 = inlined_call_operand.vmem [shape: f32[16,2], index: 1, kind: input, shape index: {}]
  %s2 = inlined_call_operand.vmem [shape: f32[1,2], index: 2, kind: input, shape index: {}]
  %s3 = inlined_call_operand.vmem [shape: f32[2,16], index: 3, kind: input, shape index: {}]
  %s4 = inlined_call_operand.vmem [shape: f32[1,16], index: 4, kind: input, shape index: {}]
  %s5 = inlined_call_operand.hbm [shape: f32[2,16,64], index: 5, kind: output, shape index: {}]
  %s6 = sld [smem:[#allocation0]]
  $region57: #{tpu_custom_call.1} parent=0
    _
  %s8 = ssub.s32 1, %s6
  %s9 = scalar_select 0, %s8, %s6
  $region1: #{tpu_custom_call.1} parent=0
    #allocation2 [shape = 'u8[16384]{0}', space=vmem, size = 0x4000, scoped, tag = 'input window, operand 0']
    #allocation3 [shape = 's32[2]{0}', space=sflag, size = 0x8, scoped, tag = 'scoped memory for tpu_custom_call.1']
    #allocation4 [shape = 's32[2]{0}', space=sflag, size = 0x8, scoped, tag = 'scoped memory for tpu_custom_call.1']
    #allocation5 [shape = 'u8[16384]{0}', space=vmem, size = 0x4000, scoped, tag = 'output window, operand 0']
    %10 = vsyncpa [#allocation3], 0
    %s11 = scalar_lea.sflag [#allocation3], 1
    %12 = vsyncpa %s11, 0
    %13 = vsyncpa [#allocation4], 0
    %s14 = scalar_lea.sflag [#allocation4], 1
    %15 = vsyncpa %s14, 0
    loop: start=0, step=1, limit=4
    $region2: #{tpu_custom_call.1} parent=1 // loop_pre_header
      _
    $region3: #{tpu_custom_call.1} parent=1 // loop_header
      %s17 = sphi 0, %s21
      %p18 = scmp.ge.s32.totalorder %s17, 4
      %s27 = sphi 0, %s29
      %s30 = sphi 0, %s27
      %s31 = sphi 0, %s30
      %s47 = sphi 0, %s31
      %s51 = sphi 0, %s51
      %s53 = sphi 0, %s51
      %s54 = sphi 0, %s53
      %s68 = sphi 0, %s54
      %s72 = sphi 0, %s72
      %s74 = sphi 0, %s72
      %s75 = sphi 0, %s74
      %s89 = sphi 0, %s75
      %s93 = sphi 0, %s93
      %s95 = sphi 0, %s93
      %s96 = sphi 0, %s95
      %s110 = sphi 0, %s96
      %s114 = sphi 0, %s114
      %s116 = sphi 0, %s114
      %s117 = sphi 0, %s116
      %s131 = sphi 0, %s117
      %s137 = sphi 0, %s139
      %s140 = sphi 0, %s137
      %s141 = sphi 0, %s140
      %s157 = sphi 0, %s141
    $region4: #{tpu_custom_call.1} parent=1 // loop_header_branch
      %20 = sbr.rel (%p18) target = $region8
    $region5: #{tpu_custom_call.1} parent=1 // loop_body
      %s22 = ssub.s32 %s17, 1
      %s23 = ssub.s32 %s17, 2
      %s24 = sadd.s32 %s17, 1
      %s25 = ssub.s32 %s17, %s24
      %p26 = scmp.eq.s32.totalorder %s25, 0
      %s28 = sadd.s32 %s27, 1
      %s29 = scalar_select %p26, %s27, %s28
      %p32 = pneg %p26
      %p33 = scmp.eq.s32.totalorder %s17, 1
      %p34 = por %p32, %p33
      %p35 = scmp.ne.s32.totalorder %s27, %s30
      %p36 = scmp.eq.s32.totalorder %s17, 0
      %p37 = por %p35, %p36
      %p38 = scmp.ne.s32.totalorder %s27, %s30
      %p39 = scmp.eq.s32.totalorder %s22, 1
      %p40 = por %p38, %p39
      %p41 = scmp.ne.s32.totalorder %s30, %s31
      %p42 = scmp.eq.s32.totalorder %s22, 0
      %p43 = por %p41, %p42
      %p44 = scmp.ne.s32.totalorder %s30, %s31
      %p45 = scmp.eq.s32.totalorder %s23, 1
      %p46 = por %p44, %p45
      %p48 = scmp.ne.s32.totalorder %s31, %s47
      %p49 = scmp.eq.s32.totalorder %s23, 0
      %p50 = por %p48, %p49
      %s52 = sadd.s32 %s51, 1
      %p55 = scmp.eq.s32.totalorder %s17, 1
      %p56 = scmp.ne.s32.totalorder %s51, %s53
      %p57 = scmp.eq.s32.totalorder %s17, 0
      %p58 = por %p56, %p57
      %p59 = scmp.ne.s32.totalorder %s51, %s53
      %p60 = scmp.eq.s32.totalorder %s22, 1
      %p61 = por %p59, %p60
      %p62 = scmp.ne.s32.totalorder %s53, %s54
      %p63 = scmp.eq.s32.totalorder %s22, 0
      %p64 = por %p62, %p63
      %p65 = scmp.ne.s32.totalorder %s53, %s54
      %p66 = scmp.eq.s32.totalorder %s23, 1
      %p67 = por %p65, %p66
      %p69 = scmp.ne.s32.totalorder %s54, %s68
      %p70 = scmp.eq.s32.totalorder %s23, 0
      %p71 = por %p69, %p70
      %s73 = sadd.s32 %s72, 1
      %p76 = scmp.eq.s32.totalorder %s17, 1
      %p77 = scmp.ne.s32.totalorder %s72, %s74
      %p78 = scmp.eq.s32.totalorder %s17, 0
      %p79 = por %p77, %p78
      %p80 = scmp.ne.s32.totalorder %s72, %s74
      %p81 = scmp.eq.s32.totalorder %s22, 1
      %p82 = por %p80, %p81
      %p83 = scmp.ne.s32.totalorder %s74, %s75
      %p84 = scmp.eq.s32.totalorder %s22, 0
      %p85 = por %p83, %p84
      %p86 = scmp.ne.s32.totalorder %s74, %s75
      %p87 = scmp.eq.s32.totalorder %s23, 1
      %p88 = por %p86, %p87
      %p90 = scmp.ne.s32.totalorder %s75, %s89
      %p91 = scmp.eq.s32.totalorder %s23, 0
      %p92 = por %p90, %p91
      %s94 = sadd.s32 %s93, 1
      %p97 = scmp.eq.s32.totalorder %s17, 1
      %p98 = scmp.ne.s32.totalorder %s93, %s95
      %p99 = scmp.eq.s32.totalorder %s17, 0
      %p100 = por %p98, %p99
      %p101 = scmp.ne.s32.totalorder %s93, %s95
      %p102 = scmp.eq.s32.totalorder %s22, 1
      %p103 = por %p101, %p102
      %p104 = scmp.ne.s32.totalorder %s95, %s96
      %p105 = scmp.eq.s32.totalorder %s22, 0
      %p106 = por %p104, %p105
      %p107 = scmp.ne.s32.totalorder %s95, %s96
      %p108 = scmp.eq.s32.totalorder %s23, 1
      %p109 = por %p107, %p108
      %p111 = scmp.ne.s32.totalorder %s96, %s110
      %p112 = scmp.eq.s32.totalorder %s23, 0
      %p113 = por %p111, %p112
      %s115 = sadd.s32 %s114, 1
      %p118 = scmp.eq.s32.totalorder %s17, 1
      %p119 = scmp.ne.s32.totalorder %s114, %s116
      %p120 = scmp.eq.s32.totalorder %s17, 0
      %p121 = por %p119, %p120
      %p122 = scmp.ne.s32.totalorder %s114, %s116
      %p123 = scmp.eq.s32.totalorder %s22, 1
      %p124 = por %p122, %p123
      %p125 = scmp.ne.s32.totalorder %s116, %s117
      %p126 = scmp.eq.s32.totalorder %s22, 0
      %p127 = por %p125, %p126
      %p128 = scmp.ne.s32.totalorder %s116, %s117
      %p129 = scmp.eq.s32.totalorder %s23, 1
      %p130 = por %p128, %p129
      %p132 = scmp.ne.s32.totalorder %s117, %s131
      %p133 = scmp.eq.s32.totalorder %s23, 0
      %p134 = por %p132, %p133
      %s135 = ssub.s32 %s17, %s24
      %p136 = scmp.eq.s32.totalorder %s135, 0
      %s138 = sadd.s32 %s137, 1
      %s139 = scalar_select %p136, %s137, %s138
      %p142 = pneg %p136
      %p143 = scmp.eq.s32.totalorder %s17, 1
      %p144 = por %p142, %p143
      %p145 = scmp.ne.s32.totalorder %s137, %s140
      %p146 = scmp.eq.s32.totalorder %s17, 0
      %p147 = por %p145, %p146
      %p148 = scmp.ne.s32.totalorder %s137, %s140
      %p149 = scmp.eq.s32.totalorder %s22, 1
      %p150 = por %p148, %p149
      %p151 = scmp.ne.s32.totalorder %s140, %s141
      %p152 = scmp.eq.s32.totalorder %s22, 0
      %p153 = por %p151, %p152
      %p154 = scmp.ne.s32.totalorder %s140, %s141
      %p155 = scmp.eq.s32.totalorder %s23, 1
      %p156 = por %p154, %p155
      %p158 = scmp.ne.s32.totalorder %s141, %s157
      %p159 = scmp.eq.s32.totalorder %s23, 0
      %p160 = por %p158, %p159
      %p161 = scmp.le.s32.totalorder 1, %s17
      %p162 = scmp.lt.s32.totalorder %s17, 3
      %p163 = pnand %p161, %p162
      %p164 = pneg %p163
      // Predicated region
      $region9: #{tpu_custom_call.1} parent=5 // pred_check
        _
      $region10: #{tpu_custom_call.1} parent=5 // pred_check_branch
        %166 = sbr.rel (%p163) target = $region12
      $region11: #{tpu_custom_call.1} parent=5 // pred_region
        %s167 = ssub.s32 %s17, 1
        // Predicated region
        $region13: #{tpu_custom_call.1} parent=11 // pred_check
          %p168 = pneg %p64
        $region14: #{tpu_custom_call.1} parent=11 // pred_check_branch
          %170 = sbr.rel (%p168) target = $region16
        $region15: #{tpu_custom_call.1} parent=11 // pred_region
          _
        $region16: #{tpu_custom_call.1} parent=11 // pred_fallthru
          _
        // Predicated region
        $region17: #{tpu_custom_call.1} parent=11 // pred_check
          %p171 = pneg %p85
        $region18: #{tpu_custom_call.1} parent=11 // pred_check_branch
          %173 = sbr.rel (%p171) target = $region20
        $region19: #{tpu_custom_call.1} parent=11 // pred_region
          _
        $region20: #{tpu_custom_call.1} parent=11 // pred_fallthru
          _
        // Predicated region
        $region21: #{tpu_custom_call.1} parent=11 // pred_check
          %p174 = pneg %p106
        $region22: #{tpu_custom_call.1} parent=11 // pred_check_branch
          %176 = sbr.rel (%p174) target = $region24
        $region23: #{tpu_custom_call.1} parent=11 // pred_region
          _
        $region24: #{tpu_custom_call.1} parent=11 // pred_fallthru
          _
        // Predicated region
        $region25: #{tpu_custom_call.1} parent=11 // pred_check
          %p177 = pneg %p127
        $region26: #{tpu_custom_call.1} parent=11 // pred_check_branch
          %179 = sbr.rel (%p177) target = $region28
        $region27: #{tpu_custom_call.1} parent=11 // pred_region
          _
        $region28: #{tpu_custom_call.1} parent=11 // pred_fallthru
          _
      $region12: #{tpu_custom_call.1} parent=5 // pred_fallthru
        _
      %p180 = scmp.lt.s32.totalorder %s17, 2
      // Predicated region
      $region29: #{tpu_custom_call.1} parent=5 // pred_check
        %p181 = pneg %p180
      $region30: #{tpu_custom_call.1} parent=5 // pred_check_branch
        %183 = sbr.rel (%p181) target = $region32
      $region31: #{tpu_custom_call.1} parent=5 // pred_region
        // Predicated region
        $region33: #{tpu_custom_call.1} parent=31 // pred_check
          %p184 = pneg %p37
        $region34: #{tpu_custom_call.1} parent=31 // pred_check_branch
          %186 = sbr.rel (%p184) target = $region36
        $region35: #{tpu_custom_call.1} parent=31 // pred_region
          %s187 = sand.u32 %s27, 1
          %s188 = scalar_lea.sflag [#allocation3], %s187
          %s189 = sand.u32 %s27, 1
          %s190 = smul.addr %s189, 16
          %s191 = scalar_lea.vmem [#allocation2], %s190
          %s193 = ssub.s32 256, 256
          %194 = vsyncadd %s188, %s193
          %s195 = smul.addr %s17, 2
          %s196 = smul.addr %s195, 128
          %s197 = scalar_lea.hbm %s0, %s196
          %s198 = sshll.u32 %s191, 4
          %s199 = int_to_ptr.vmem [resolvable:$true] %s198
          %204 = dma.hbm_to_vmem [thread:$0]  %s197, 256, %s199, %s188, 128, 128, 8
        $region36: #{tpu_custom_call.1} parent=31 // pred_fallthru
          _
      $region32: #{tpu_custom_call.1} parent=5 // pred_fallthru
        _
      %p205 = scmp.le.s32.totalorder 1, %s17
      %p206 = scmp.lt.s32.totalorder %s17, 3
      %p207 = pnand %p205, %p206
      %p208 = pneg %p207
      // Predicated region
      $region37: #{tpu_custom_call.1} parent=5 // pred_check
        _
      $region38: #{tpu_custom_call.1} parent=5 // pred_check_branch
        %210 = sbr.rel (%p207) target = $region40
      $region39: #{tpu_custom_call.1} parent=5 // pred_region
        %s211 = ssub.s32 %s17, 1
        %s212 = sand.u32 %s30, 1
        %s213 = scalar_lea.sflag [#allocation3], %s212
        %s214 = sand.u32 %s30, 1
        %s215 = smul.addr %s214, 16
        %s216 = scalar_lea.vmem [#allocation2], %s215
        // Predicated region
        $region41: #{tpu_custom_call.1} parent=39 // pred_check
          %p217 = pneg %p43
        $region42: #{tpu_custom_call.1} parent=39 // pred_check_branch
          %219 = sbr.rel (%p217) target = $region44
        $region43: #{tpu_custom_call.1} parent=39 // pred_region
          %220 = dma.done %s213, 256
        $region44: #{tpu_custom_call.1} parent=39 // pred_fallthru
          _
        %s221 = sand.u32 %s30, 1
        %s222 = scalar_lea.sflag [#allocation3], %s221
        %s223 = sand.u32 %s30, 1
        %s224 = smul.addr %s223, 16
        %s225 = scalar_lea.vmem [#allocation2], %s224
        %p226 = pneg %p43
        %p227 = pneg %p40
        %p228 = pneg %p64
        %p229 = pneg %p61
        %p230 = pneg %p85
        %p231 = pneg %p82
        %p232 = pneg %p106
        %p233 = pneg %p103
        %p234 = pneg %p127
        %p235 = pneg %p124
        %p236 = pneg %p153
        %p237 = pneg %p150
        %s238 = sand.u32 %s140, 1
        %s239 = scalar_lea.sflag [#allocation4], %s238
        %s240 = sand.u32 %s140, 1
        %s241 = smul.addr %s240, 16
        %s242 = scalar_lea.vmem [#allocation5], %s241
        %v243 = vld [vmem:[%s216] sm:$0xff]
        %v244 = vld [vmem:[%s216 + $0x8] sm:$0xff]
        %vm245 = vcmask 523264
        %v246 = vsel %vm245, %v243, 0.0
        %247 = vadd.xlane.f32.xlu0 %v246
        %v248 = vpop.xlane.xlu0 %247
        %v249 = vsel %vm245, %v244, 0.0
        %250 = vadd.xlane.f32.xlu0 %v249
        %v251 = vpop.xlane.xlu0 %250
        %v252 = vadd.f32 %v248, 0.0
        %v253 = vadd.f32 %v251, 0.0
        %v254 = vld [vmem:[%s1] sm:$0xff]
        %v255 = vld [vmem:[%s1 + $0x8] sm:$0xff]
        %v256 = vld [vmem:[%s2] sm:$0x1]
        %v259 = vlaneseq
        %v260 = vand.u32 %v259, 127
        %v261 = vlaneseq
        %v262 = vshrl.u32 %v261, 7
        %v263 = vsub.s32 %v260, %v262
        %v264 = vrot.slane %v252, %v263
        %v265 = vadd.s32 %v260, 4294967288
        %v266 = vlaneseq
        %v267 = vshrl.u32 %v266, 7
        %v268 = vsub.s32 %v265, %v267
        %v269 = vrot.slane %v253, %v268
        %vm270 = vcmask 130112
        %v271 = vsel %vm270, %v269, %v264
        %vm272 = vcmask 130048
        %v273 = vsel %vm272, %v271, 0
        %275 = vmatprep.subr.mxu0 0.0
        %276 = vmatpush1.msra.mxu0 %v254
        %277 = vmatprep.subr.mxu0 0.0
        %278 = vmatpush1.msra.mxu0 %v255
        %279 = vmatprep.subr.mxu0 0.0
        %280 = vmatpush1.msra.mxu0 0.0
        %281 = vmatprep.subr.mxu0 0.0
        %282 = vmatpush1.msra.mxu0 0.0
        %283 = vmatprep.subr.mxu0 0.0
        %284 = vmatpush1.msra.mxu0 0.0
        %285 = vmatprep.subr.mxu0 0.0
        %286 = vmatpush1.msra.mxu0 0.0
        %287 = vmatprep.subr.mxu0 0.0
        %288 = vmatpush1.msra.mxu0 0.0
        %289 = vmatprep.subr.mxu0 0.0
        %290 = vmatpush1.msra.mxu0 0.0
        %291 = vmatprep.subr.mxu0 0.0
        %292 = vmatpush1.msra.mxu0 0.0
        %293 = vmatprep.subr.mxu0 0.0
        %294 = vmatpush1.msra.mxu0 0.0
        %295 = vmatprep.subr.mxu0 0.0
        %296 = vmatpush1.msra.mxu0 0.0
        %297 = vmatprep.subr.mxu0 0.0
        %298 = vmatpush1.msra.mxu0 0.0
        %299 = vmatprep.subr.mxu0 0.0
        %300 = vmatpush1.msra.mxu0 0.0
        %301 = vmatprep.subr.mxu0 0.0
        %302 = vmatpush1.msra.mxu0 0.0
        %303 = vmatprep.subr.mxu0 0.0
        %304 = vmatpush1.msra.mxu0 0.0
        %305 = vmatprep.subr.mxu0 0.0
        %306 = vmatpush1.msra.mxu0 0.0
        %307 = vmatprep.subr.mxu0 0.0
        %308 = vmatpush1.msra.mxu0 0.0
        %309 = vmatprep.subr.mxu0 0.0
        %310 = vmatpush1.msra.mxu0 0.0
        %311 = vmatprep.subr.mxu0 0.0
        %312 = vmatpush1.msra.mxu0 0.0
        %313 = vmatprep.subr.mxu0 0.0
        %314 = vmatpush1.msra.mxu0 0.0
        %315 = vmatprep.subr.mxu0 0.0
        %316 = vmatpush1.msra.mxu0 0.0
        %317 = vmatprep.subr.mxu0 0.0
        %318 = vmatpush1.msra.mxu0 0.0
        %319 = vmatprep.subr.mxu0 0.0
        %320 = vmatpush1.msra.mxu0 0.0
        %321 = vmatprep.subr.mxu0 0.0
        %322 = vmatpush1.msra.mxu0 0.0
        %323 = vmatprep.subr.mxu0 0.0
        %324 = vmatpush1.msra.mxu0 0.0
        %325 = vmatprep.subr.mxu0 0.0
        %326 = vmatpush1.msra.mxu0 0.0
        %327 = vmatprep.subr.mxu0 0.0
        %328 = vmatpush1.msra.mxu0 0.0
        %329 = vmatprep.subr.mxu0 0.0
        %330 = vmatpush1.msra.mxu0 0.0
        %331 = vmatprep.subr.mxu0 0.0
        %332 = vmatpush1.msra.mxu0 0.0
        %333 = vmatprep.subr.mxu0 0.0
        %334 = vmatpush1.msra.mxu0 0.0
        %335 = vmatprep.subr.mxu0 0.0
        %336 = vmatpush1.msra.mxu0 0.0
        %337 = vmatprep.subr.mxu0 0.0
        %338 = vmatpush1.msra.mxu0 0.0
        %339 = vmatprep.mubr.f32.mxu0 0.0
        %340 = vmatmul.mubr.f32.gmra.mrb[0].mxu0 %v273
        %v341 = vpop.f32.mrb[0].mxu0
        %v342 = vadd.f32 %v256, %v341
        %v343 = vpop.f32.mrb[0].mxu0
        %344 = vdwg.mxu0
        %v345 = vmax.f32 %v342, 0.0
        %v346 = vld [vmem:[%s3] sm:$0x3]
        %v347 = vld [vmem:[%s4] sm:$0x1]
        %vm348 = vcmask 15360
        %v350 = vsel %vm348, %v345, 0
        %vm352 = vcmask 1041408
        %v354 = vsel %vm352, %v346, 0
        %356 = vmatprep.subr.mxu0 0.0
        %357 = vmatpush1.msra.mxu0 %v354
        %358 = vmatprep.subr.mxu0 0.0
        %359 = vmatpush1.msra.mxu0 0.0
        %360 = vmatprep.subr.mxu0 0.0
        %361 = vmatpush1.msra.mxu0 0.0
        %362 = vmatprep.subr.mxu0 0.0
        %363 = vmatpush1.msra.mxu0 0.0
        %364 = vmatprep.subr.mxu0 0.0
        %365 = vmatpush1.msra.mxu0 0.0
        %366 = vmatprep.subr.mxu0 0.0
        %367 = vmatpush1.msra.mxu0 0.0
        %368 = vmatprep.subr.mxu0 0.0
        %369 = vmatpush1.msra.mxu0 0.0
        %370 = vmatprep.subr.mxu0 0.0
        %371 = vmatpush1.msra.mxu0 0.0
        %372 = vmatprep.subr.mxu0 0.0
        %373 = vmatpush1.msra.mxu0 0.0
        %374 = vmatprep.subr.mxu0 0.0
        %375 = vmatpush1.msra.mxu0 0.0
        %376 = vmatprep.subr.mxu0 0.0
        %377 = vmatpush1.msra.mxu0 0.0
        %378 = vmatprep.subr.mxu0 0.0
        %379 = vmatpush1.msra.mxu0 0.0
        %380 = vmatprep.subr.mxu0 0.0
        %381 = vmatpush1.msra.mxu0 0.0
        %382 = vmatprep.subr.mxu0 0.0
        %383 = vmatpush1.msra.mxu0 0.0
        %384 = vmatprep.subr.mxu0 0.0
        %385 = vmatpush1.msra.mxu0 0.0
        %386 = vmatprep.subr.mxu0 0.0
        %387 = vmatpush1.msra.mxu0 0.0
        %388 = vmatprep.subr.mxu0 0.0
        %389 = vmatpush1.msra.mxu0 0.0
        %390 = vmatprep.subr.mxu0 0.0
        %391 = vmatpush1.msra.mxu0 0.0
        %392 = vmatprep.subr.mxu0 0.0
        %393 = vmatpush1.msra.mxu0 0.0
        %394 = vmatprep.subr.mxu0 0.0
        %395 = vmatpush1.msra.mxu0 0.0
        %396 = vmatprep.subr.mxu0 0.0
        %397 = vmatpush1.msra.mxu0 0.0
        %398 = vmatprep.subr.mxu0 0.0
        %399 = vmatpush1.msra.mxu0 0.0
        %400 = vmatprep.subr.mxu0 0.0
        %401 = vmatpush1.msra.mxu0 0.0
        %402 = vmatprep.subr.mxu0 0.0
        %403 = vmatpush1.msra.mxu0 0.0
        %404 = vmatprep.subr.mxu0 0.0
        %405 = vmatpush1.msra.mxu0 0.0
        %406 = vmatprep.subr.mxu0 0.0
        %407 = vmatpush1.msra.mxu0 0.0
        %408 = vmatprep.subr.mxu0 0.0
        %409 = vmatpush1.msra.mxu0 0.0
        %410 = vmatprep.subr.mxu0 0.0
        %411 = vmatpush1.msra.mxu0 0.0
        %412 = vmatprep.subr.mxu0 0.0
        %413 = vmatpush1.msra.mxu0 0.0
        %414 = vmatprep.subr.mxu0 0.0
        %415 = vmatpush1.msra.mxu0 0.0
        %416 = vmatprep.subr.mxu0 0.0
        %417 = vmatpush1.msra.mxu0 0.0
        %418 = vmatprep.subr.mxu0 0.0
        %419 = vmatpush1.msra.mxu0 0.0
        %420 = vmatprep.mubr.f32.mxu0 0.0
        %421 = vmatmul.mubr.f32.gmra.mrb[0].mxu0 %v350
        %v422 = vpop.f32.mrb[0].mxu0
        %v423 = vadd.f32 %v347, %v422
        %v424 = vpop.f32.mrb[0].mxu0
        %425 = vdwg.mxu0
        %v426 = vxor.u32 %v423, 2147483648
        %v427 = vmul.f32 %v426, 1.442695
        %v428 = vpow.pop %v427
        %v429 = vadd.f32 %v428, 1.0
        %v430 = vrcp.pop %v429
        %v431 = vmul.f32 1.0, %v430
        %v432 = vlaneseq
        %v433 = vshrl.u32 %v432, 7
        %v434 = vsub.s32 0, %v433
        %v435 = vrot.slane %v431, %v434
        %437 = vbcast.lane.b32.xlu0 %v435, 256
        %v438 = vpop.permute.xlu0 %437
        %s440 = sor.u32 256, 8
        %441 = vbcast.lane.b32.xlu0 %v435, %s440
        %v442 = vpop.permute.xlu0 %441
        %v443 = vmul.f32 %v243, %v438
        %v444 = vmul.f32 %v244, %v442
        %445 = vst.msk [vmem:[%s242] sm:$0xff] %vm245, %v443
        %446 = vst.msk [vmem:[%s242 + $0x8] sm:$0xff] %vm245, %v444
        %s447 = sand.u32 %s140, 1
        %s448 = scalar_lea.sflag [#allocation4], %s447
        %s449 = sand.u32 %s140, 1
        %s450 = smul.addr %s449, 16
        %s451 = scalar_lea.vmem [#allocation5], %s450
        // Predicated region
        $region45: #{tpu_custom_call.1} parent=39 // pred_check
          %p452 = pneg %p150
        $region46: #{tpu_custom_call.1} parent=39 // pred_check_branch
          %454 = sbr.rel (%p452) target = $region48
        $region47: #{tpu_custom_call.1} parent=39 // pred_region
          %s456 = ssub.s32 256, 256
          %457 = vsyncadd %s448, %s456
          %s458 = smul.addr %s22, 2
          %s459 = smul.addr %s458, 128
          %s460 = scalar_lea.hbm %s5, %s459
          %s461 = sshll.u32 %s451, 4
          %s462 = int_to_ptr.vmem [resolvable:$true] %s461
          %467 = dma.vmem_to_hbm [thread:$0]  %s462, 256, %s460, %s448, 128, 128, 8
        $region48: #{tpu_custom_call.1} parent=39 // pred_fallthru
          _
      $region40: #{tpu_custom_call.1} parent=5 // pred_fallthru
        _
      %p468 = scmp.le.s32.totalorder 2, %s17
      // Predicated region
      $region49: #{tpu_custom_call.1} parent=5 // pred_check
        %p469 = pneg %p468
      $region50: #{tpu_custom_call.1} parent=5 // pred_check_branch
        %471 = sbr.rel (%p469) target = $region52
      $region51: #{tpu_custom_call.1} parent=5 // pred_region
        %s472 = ssub.s32 %s17, 2
        // Predicated region
        $region53: #{tpu_custom_call.1} parent=51 // pred_check
          %p473 = pneg %p156
        $region54: #{tpu_custom_call.1} parent=51 // pred_check_branch
          %475 = sbr.rel (%p473) target = $region56
        $region55: #{tpu_custom_call.1} parent=51 // pred_region
          %s476 = sand.u32 %s141, 1
          %s477 = scalar_lea.sflag [#allocation4], %s476
          %s478 = sand.u32 %s141, 1
          %s479 = smul.addr %s478, 16
          %s480 = scalar_lea.vmem [#allocation5], %s479
          %481 = dma.done %s477, 256
        $region56: #{tpu_custom_call.1} parent=51 // pred_fallthru
          _
      $region52: #{tpu_custom_call.1} parent=5 // pred_fallthru
        _
    $region6: #{tpu_custom_call.1} parent=1 // loop_footer
      %s21 = sadd.s32 1, %s17
    $region7: #{tpu_custom_call.1} parent=1 // loop_footer_branch
      %16 = sbr.rel target = $region3
    $region8: #{tpu_custom_call.1} parent=1 // loop_exit
      _
    %482 = vsyncpa [#allocation3], 1
    %s483 = scalar_lea.sflag [#allocation3], 1
    %484 = vsyncpa %s483, 1
    %485 = vsyncpa [#allocation4], 1
    %s486 = scalar_lea.sflag [#allocation4], 1
    %487 = vsyncpa %s486, 1

</llo_original>
